<compile_context>
chip_gen: v6e
topology: v6e:2x2x1
jax: 0.10.0
libtpu: 0.0.40
codegen_flags: <defaults>
</compile_context>

<pallas_src>
import jax
import jax.numpy as jnp
from jax.experimental import pallas as pl
from jax.experimental.pallas import tpu as pltpu


def _pad_prompter_kernel(prompt_ref, x_ref, o_ref):
    # prompt_ref: (1, Ft); x_ref / o_ref: (bt, Ft). Lane-dense broadcast add.
    o_ref[...] = x_ref[...] + prompt_ref[...]


def _divisor_tiles(total, unit):
    """Divisors of `total` that are multiples of `unit`, plus `total` itself
    (a block equal to the full dim is always legal regardless of alignment)."""
    cands = {total}
    d = unit
    while d < total:
        if total % d == 0:
            cands.add(d)
        d += unit
    return sorted(cands)


def _vmem_cap_bytes():
    """Per-generation VMEM budget: ~3/4 of physical VMEM (96 MiB on v5e/v6e,
    48 MiB on v7x); conservative 48 MiB fallback if the query fails."""
    cap = 64 << 20
    try:
        info = pltpu.get_tpu_info()
        cap = int(getattr(info, "vmem_capacity_bytes", cap))
    except Exception:
        pass
    return max(16 << 20, (cap * 3) // 4)


def _choose_tiles(B, F, itemsize, target_tile_bytes):
    """Pick (bt, Ft): bt a multiple-of-8 divisor of B (or B itself), Ft a
    multiple-of-128 divisor of F (or F itself), maximizing tile size under
    `target_tile_bytes`, then ensure >= 2 grid steps when possible."""
    bt_cands = _divisor_tiles(B, 8)      # second-minor: mult of 8 or full B
    ft_cands = _divisor_tiles(F, 128)    # minor (lane): mult of 128 or full F

    best = None  # (product, ft, bt) -- prefer bigger tile, then bigger Ft
    for bt in bt_cands:
        for ft in ft_cands:
            if bt * ft * itemsize <= target_tile_bytes:
                cand = (bt * ft, ft, bt)
                if best is None or cand > best:
                    best = cand

    if best is not None:
        _, ft, bt = best
    else:
        # No divisor pair fits the target (e.g. huge F not divisible by 128).
        # Use the smallest batch tile and a lane-aligned non-dividing feature
        # tile; Pallas masks the partial last block correctly.
        bt = bt_cands[0]
        if F >= 128:
            ft = (target_tile_bytes // (bt * itemsize)) // 128 * 128
            ft = max(128, min(ft, F))
        else:
            ft = F

    # Guarantee >= 2 grid steps when possible so megacore (v7x, 2 TCs) has
    # work to shard; the split stays within the VMEM target by construction.
    if pl.cdiv(B, bt) * pl.cdiv(F, ft) < 2:
        smaller_ft = [c for c in ft_cands if c < ft]
        smaller_bt = [c for c in bt_cands if c < bt]
        if smaller_ft:
            ft = smaller_ft[-1]
        elif smaller_bt:
            bt = smaller_bt[-1]
    return bt, ft


def _build_pad_prompter_call(B, F, dtype, bt, ft, vmem_limit, cost,
                             single_buffer_prompt):
    prompt_kwargs = {}
    if single_buffer_prompt:
        # Prompt block is reused across the whole inner batch loop; a second
        # buffer only wastes VMEM that could go to bigger x/out tiles.
        prompt_kwargs["pipeline_mode"] = pl.Buffered(1)

    # Feature axis OUTER, batch axis INNER: the (1, Ft) prompt block index is
    # constant across the inner loop, so it is fetched only F//Ft times.
    grid = (pl.cdiv(F, ft), pl.cdiv(B, bt))

    return pl.pallas_call(
        _pad_prompter_kernel,
        out_shape=jax.ShapeDtypeStruct((B, F), dtype),
        grid_spec=pltpu.PrefetchScalarGridSpec(
            num_scalar_prefetch=0,
            grid=grid,
            in_specs=[
                pl.BlockSpec((1, ft), lambda j, i: (0, j), **prompt_kwargs),
                pl.BlockSpec((bt, ft), lambda j, i: (i, j)),
            ],
            out_specs=pl.BlockSpec((bt, ft), lambda j, i: (i, j)),
        ),
        compiler_params=pltpu.CompilerParams(
            dimension_semantics=("parallel", "parallel"),
            vmem_limit_bytes=vmem_limit),
        cost_estimate=cost,
    )


def pad_prompter_forward(x, pad_left, pad_right, pad_up, pad_down,
                         *, image_size, pad_size):
    B, C, H, W = x.shape
    assert (C, H, W) == (3, image_size, image_size)
    inner = image_size - 2 * pad_size

    # Assemble the prompt frame once (same construction as the PyTorch
    # module), then flatten everything to a lane-dense layout.
    zeros_mid = jnp.zeros((1, 3, inner, inner), x.dtype)
    mid = jnp.concatenate([pad_left, zeros_mid, pad_right], axis=3)
    prompt = jnp.concatenate([pad_up, mid, pad_down], axis=2)      # (1,3,H,W)

    F = 3 * H * W
    prompt_flat = prompt.reshape(1, F)
    x_flat = x.reshape(B, F)

    itemsize = jnp.dtype(x.dtype).itemsize
    cap = _vmem_cap_bytes()
    # ~8 MiB tiles (input side); 2x in + 2x out double-buffers + slack must
    # stay under the per-generation cap.
    target_tile_bytes = min(8 << 20, max(512 << 10, (cap - (6 << 20)) // 4))
    bt, ft = _choose_tiles(B, F, itemsize, target_tile_bytes)

    tile_bytes = bt * ft * itemsize
    needed = 4 * tile_bytes + 2 * ft * itemsize + (2 << 20)
    vmem_limit = int(min(max(needed, 16 << 20), cap))

    cost = pl.CostEstimate(flops=B * F, transcendentals=0,
                           bytes_accessed=(2 * B * F + F) * itemsize)

    try:
        call = _build_pad_prompter_call(B, F, x.dtype, bt, ft, vmem_limit,
                                        cost, single_buffer_prompt=True)
        out_flat = call(prompt_flat, x_flat)
        out_flat = jax.block_until_ready(out_flat)
    except Exception:
        # Fallback: some runtimes may reject buffer_count=1; the extra prompt
        # buffer costs at most one Ft-row of VMEM, already budgeted above.
        call = _build_pad_prompter_call(B, F, x.dtype, bt, ft, vmem_limit,
                                        cost, single_buffer_prompt=False)
        out_flat = call(prompt_flat, x_flat)

    return out_flat.reshape(B, 3, H, W)


def pad_prompter_reference(x, pad_left, pad_right, pad_up, pad_down,
                           *, image_size, pad_size):
    inner = image_size - 2 * pad_size
    prompt = jnp.zeros((1, 3, inner, inner), x.dtype)
    prompt = jnp.concatenate([pad_left, prompt, pad_right], axis=3)
    prompt = jnp.concatenate([pad_up, prompt, pad_down], axis=2)
    return x + prompt


def _run_case(B, image_size, pad_size, key):
    inner = image_size - 2 * pad_size
    k_x, k_l, k_r, k_u, k_d = jax.random.split(key, 5)
    x = jax.random.normal(k_x, (B, 3, image_size, image_size), jnp.float32)
    pad_left = jax.random.normal(k_l, (1, 3, inner, pad_size), jnp.float32)
    pad_right = jax.random.normal(k_r, (1, 3, inner, pad_size), jnp.float32)
    pad_up = jax.random.normal(k_u, (1, 3, pad_size, image_size), jnp.float32)
    pad_down = jax.random.normal(k_d, (1, 3, pad_size, image_size), jnp.float32)

    out = pad_prompter_forward(x, pad_left, pad_right, pad_up, pad_down,
                               image_size=image_size, pad_size=pad_size)
    out = jax.block_until_ready(out)
    ref = pad_prompter_reference(x, pad_left, pad_right, pad_up, pad_down,
                                 image_size=image_size, pad_size=pad_size)
    assert out.shape == (B, 3, image_size, image_size)
    assert jnp.allclose(out, ref, atol=1e-6), "mismatch vs reference"


if __name__ == "__main__":
    key = jax.random.PRNGKey(0)
    k1, k2, k3 = jax.random.split(key, 3)
    # Small batch: exercises the forced F-split (>= 2 grid steps for megacore).
    _run_case(B=2, image_size=32, pad_size=4, key=k1)
    # Larger batch: bt is a multiple-of-8 divisor of B, clean batch tiling.
    _run_case(B=16, image_size=32, pad_size=4, key=k2)
    # B with no multiple-of-8 divisor -> full-batch blocks, no partial tiles.
    _run_case(B=12, image_size=16, pad_size=2, key=k3)
    print("KERNEL_OK")
</pallas_src>

<mosaic_0001>
module attributes {stable_mosaic.version = 11 : i64} {
  func.func @_pad_prompter_kernel(%arg0: i32, %arg1: i32, %arg2: memref<1x1536xf32, #tpu.memory_space<vmem>>, %arg3: memref<2x1536xf32, #tpu.memory_space<vmem>>, %arg4: memref<2x1536xf32, #tpu.memory_space<vmem>>) attributes {dimension_semantics = [#tpu.dimension_semantics<parallel>, #tpu.dimension_semantics<parallel>], iteration_bounds = array<i64: 2, 1>, scalar_prefetch = 0 : i64, scratch_operands = 0 : i64, tpu.core_type = #tpu.core_type<tc>, window_params = [{pipeline_mode = #tpu.pipeline_mode<synchronous>, transform_indices = @transform_0, window_bounds = array<i64: 1, 1536>}, {transform_indices = @transform_1, window_bounds = array<i64: 2, 1536>}, {transform_indices = @transform_2, window_bounds = array<i64: 2, 1536>}]} {
    %c0 = arith.constant 0 : index
    %c0_0 = arith.constant 0 : index
    %0 = vector.load %arg3[%c0, %c0_0] : memref<2x1536xf32, #tpu.memory_space<vmem>>, vector<2x1536xf32>
    %c0_1 = arith.constant 0 : index
    %c0_2 = arith.constant 0 : index
    %1 = vector.load %arg2[%c0_1, %c0_2] : memref<1x1536xf32, #tpu.memory_space<vmem>>, vector<1x1536xf32>
    %2 = vector.broadcast %1 : vector<1x1536xf32> to vector<2x1536xf32>
    %3 = arith.addf %0, %2 : vector<2x1536xf32>
    %c0_3 = arith.constant 0 : index
    %c0_4 = arith.constant 0 : index
    %4 = vector.load %arg4[%c0_3, %c0_4] : memref<2x1536xf32, #tpu.memory_space<vmem>>, vector<2x1536xf32>
    tpu.vector_store %arg4[%c0_3, %c0_4], %3 {strides = array<i32>} : memref<2x1536xf32, #tpu.memory_space<vmem>>, vector<2x1536xf32>,
    return
  }
  func.func @transform_0(%arg0: i32, %arg1: i32) -> (i32, i32) {
    %c0_i32 = arith.constant 0 : i32
    %c0_i32_0 = arith.constant 0 : i32
    return %c0_i32, %arg0 : i32, i32
  }
  func.func @transform_1(%arg0: i32, %arg1: i32) -> (i32, i32) {
    %c0_i32 = arith.constant 0 : i32
    return %arg1, %arg0 : i32, i32
  }
  func.func @transform_2(%arg0: i32, %arg1: i32) -> (i32, i32) {
    %c0_i32 = arith.constant 0 : i32
    return %arg1, %arg0 : i32, i32
  }
}

module attributes {stable_mosaic.version = 11 : i64} {
  func.func @_pad_prompter_kernel(%arg0: i32, %arg1: i32, %arg2: memref<1x1536xf32, #tpu.memory_space<vmem>>, %arg3: memref<2x1536xf32, #tpu.memory_space<vmem>>, %arg4: memref<2x1536xf32, #tpu.memory_space<vmem>>) attributes {dimension_semantics = [#tpu.dimension_semantics<parallel>, #tpu.dimension_semantics<parallel>], iteration_bounds = array<i64: 2, 1>, scalar_prefetch = 0 : i64, scratch_operands = 0 : i64, tpu.core_type = #tpu.core_type<tc>, window_params = [{transform_indices = @transform_0, window_bounds = array<i64: 1, 1536>}, {transform_indices = @transform_1, window_bounds = array<i64: 2, 1536>}, {transform_indices = @transform_2, window_bounds = array<i64: 2, 1536>}]} {
    %c0 = arith.constant 0 : index
    %c0_0 = arith.constant 0 : index
    %0 = vector.load %arg3[%c0, %c0_0] : memref<2x1536xf32, #tpu.memory_space<vmem>>, vector<2x1536xf32>
    %c0_1 = arith.constant 0 : index
    %c0_2 = arith.constant 0 : index
    %1 = vector.load %arg2[%c0_1, %c0_2] : memref<1x1536xf32, #tpu.memory_space<vmem>>, vector<1x1536xf32>
    %2 = vector.broadcast %1 : vector<1x1536xf32> to vector<2x1536xf32>
    %3 = arith.addf %0, %2 : vector<2x1536xf32>
    %c0_3 = arith.constant 0 : index
    %c0_4 = arith.constant 0 : index
    %4 = vector.load %arg4[%c0_3, %c0_4] : memref<2x1536xf32, #tpu.memory_space<vmem>>, vector<2x1536xf32>
    tpu.vector_store %arg4[%c0_3, %c0_4], %3 {strides = array<i32>} : memref<2x1536xf32, #tpu.memory_space<vmem>>, vector<2x1536xf32>,
    return
  }
  func.func @transform_0(%arg0: i32, %arg1: i32) -> (i32, i32) {
    %c0_i32 = arith.constant 0 : i32
    %c0_i32_0 = arith.constant 0 : i32
    return %c0_i32, %arg0 : i32, i32
  }
  func.func @transform_1(%arg0: i32, %arg1: i32) -> (i32, i32) {
    %c0_i32 = arith.constant 0 : i32
    return %arg1, %arg0 : i32, i32
  }
  func.func @transform_2(%arg0: i32, %arg1: i32) -> (i32, i32) {
    %c0_i32 = arith.constant 0 : i32
    return %arg1, %arg0 : i32, i32
  }
}

</mosaic_0001>

<llo_original>
// kernel: tpu_custom_call.1
$region0: #{tpu_custom_call.1}
  #allocation0 [shape = 'u32[]', space=smem, size = 0x4, offset = 0x4, fixed_abs, tag = 'smem constant byte address 0x4 - core index']
  #allocation1 [shape = 'u32[144,128]{1,0:T(1,128)}', space=vmem, size = 0x12000, scoped, tag = 'internal scratch']
  %s0 = inlined_call_operand.hbm [shape: f32[1,3072], index: 0, kind: input, shape index: {}]
  %s1 = inlined_call_operand.hbm [shape: f32[2,3072], index: 1, kind: input, shape index: {}]
  %s2 = inlined_call_operand.hbm [shape: f32[2,3072], index: 2, kind: output, shape index: {}]
  %s3 = sld [smem:[#allocation0]]
  $region49: #{tpu_custom_call.1} parent=0
    _
  %s5 = ssub.s32 1, %s3
  %s6 = scalar_select 0, %s5, %s3
  $region1: #{tpu_custom_call.1} parent=0
    #allocation2 [shape = 'u8[6144]{0}', space=vmem, size = 0x1800, scoped, tag = 'input window, operand 0, single buffered']
    #allocation3 [shape = 's32[2]{0}', space=sflag, size = 0x8, scoped, tag = 'scoped memory for tpu_custom_call.1']
    #allocation4 [shape = 's32[2]{0}', space=sflag, size = 0x8, scoped, tag = 'scoped memory for tpu_custom_call.1']
    #allocation5 [shape = 'u8[24576]{0}', space=vmem, size = 0x6000, scoped, tag = 'input window, operand 1']
    #allocation6 [shape = 's32[2]{0}', space=sflag, size = 0x8, scoped, tag = 'scoped memory for tpu_custom_call.1']
    #allocation7 [shape = 'u8[24576]{0}', space=vmem, size = 0x6000, scoped, tag = 'output window, operand 0']
    %7 = vsyncpa [#allocation3], 0
    %8 = vsyncpa [#allocation6], 0
    %s9 = scalar_lea.sflag [#allocation6], 1
    %10 = vsyncpa %s9, 0
    %11 = vsyncpa [#allocation4], 0
    %s12 = scalar_lea.sflag [#allocation4], 1
    %13 = vsyncpa %s12, 0
    loop: start=0, step=1, limit=4
    $region2: #{tpu_custom_call.1} parent=1 // loop_pre_header
      _
    $region3: #{tpu_custom_call.1} parent=1 // loop_header
      %s15 = sphi 0, %s19
      %p16 = scmp.ge.s32.totalorder %s15, 4
      %s22 = sphi 0, %s34
      %s23 = sphi 0, %s30
      %s24 = sphi 0, %s22
      %s25 = sphi 0, %s23
      %s26 = sphi 0, %s24
      %s27 = sphi 0, %s25
      %s37 = sphi 0, %s39
      %s40 = sphi 0, %s37
      %s41 = sphi 0, %s40
      %s57 = sphi 0, %s41
      %s65 = sphi 0, %s67
      %s68 = sphi 0, %s65
      %s69 = sphi 0, %s68
      %s85 = sphi 0, %s69
      %s93 = sphi 0, %s95
      %s96 = sphi 0, %s93
      %s97 = sphi 0, %s96
      %s113 = sphi 0, %s97
    $region4: #{tpu_custom_call.1} parent=1 // loop_header_branch
      %18 = sbr.rel (%p16) target = $region8
    $region5: #{tpu_custom_call.1} parent=1 // loop_body
      %s20 = ssub.s32 %s15, 1
      %s21 = ssub.s32 %s15, 2
      %s28 = sadd.s32 1, %s23
      %p29 = scmp.ge.s32.totalorder %s28, 1
      %s30 = scalar_select %p29, 0, %s28
      %s31 = sadd.s32 1, %s22
      %s32 = scalar_select %p29, %s31, %s22
      %p33 = scmp.ge.s32.totalorder %s32, 2
      %s34 = scalar_select %p33, 0, %s32
      %s35 = ssub.s32 %s22, %s34
      %p36 = scmp.eq.s32.totalorder %s35, 0
      %s38 = sadd.s32 %s37, 1
      %s39 = scalar_select %p36, %s37, %s38
      %p42 = pneg %p36
      %p43 = scmp.eq.s32.totalorder %s15, 1
      %p44 = por %p42, %p43
      %p45 = scmp.ne.s32.totalorder %s37, %s40
      %p46 = scmp.eq.s32.totalorder %s15, 0
      %p47 = por %p45, %p46
      %p48 = scmp.ne.s32.totalorder %s37, %s40
      %p49 = scmp.eq.s32.totalorder %s20, 1
      %p50 = por %p48, %p49
      %p51 = scmp.ne.s32.totalorder %s40, %s41
      %p52 = scmp.eq.s32.totalorder %s20, 0
      %p53 = por %p51, %p52
      %p54 = scmp.ne.s32.totalorder %s40, %s41
      %p55 = scmp.eq.s32.totalorder %s21, 1
      %p56 = por %p54, %p55
      %p58 = scmp.ne.s32.totalorder %s41, %s57
      %p59 = scmp.eq.s32.totalorder %s21, 0
      %p60 = por %p58, %p59
      %s61 = ssub.s32 %s23, %s30
      %s62 = ssub.s32 %s22, %s34
      %s63 = sor.u32 %s61, %s62
      %p64 = scmp.eq.s32.totalorder %s63, 0
      %s66 = sadd.s32 %s65, 1
      %s67 = scalar_select %p64, %s65, %s66
      %p70 = pneg %p64
      %p71 = scmp.eq.s32.totalorder %s15, 1
      %p72 = por %p70, %p71
      %p73 = scmp.ne.s32.totalorder %s65, %s68
      %p74 = scmp.eq.s32.totalorder %s15, 0
      %p75 = por %p73, %p74
      %p76 = scmp.ne.s32.totalorder %s65, %s68
      %p77 = scmp.eq.s32.totalorder %s20, 1
      %p78 = por %p76, %p77
      %p79 = scmp.ne.s32.totalorder %s68, %s69
      %p80 = scmp.eq.s32.totalorder %s20, 0
      %p81 = por %p79, %p80
      %p82 = scmp.ne.s32.totalorder %s68, %s69
      %p83 = scmp.eq.s32.totalorder %s21, 1
      %p84 = por %p82, %p83
      %p86 = scmp.ne.s32.totalorder %s69, %s85
      %p87 = scmp.eq.s32.totalorder %s21, 0
      %p88 = por %p86, %p87
      %s89 = ssub.s32 %s23, %s30
      %s90 = ssub.s32 %s22, %s34
      %s91 = sor.u32 %s89, %s90
      %p92 = scmp.eq.s32.totalorder %s91, 0
      %s94 = sadd.s32 %s93, 1
      %s95 = scalar_select %p92, %s93, %s94
      %p98 = pneg %p92
      %p99 = scmp.eq.s32.totalorder %s15, 1
      %p100 = por %p98, %p99
      %p101 = scmp.ne.s32.totalorder %s93, %s96
      %p102 = scmp.eq.s32.totalorder %s15, 0
      %p103 = por %p101, %p102
      %p104 = scmp.ne.s32.totalorder %s93, %s96
      %p105 = scmp.eq.s32.totalorder %s20, 1
      %p106 = por %p104, %p105
      %p107 = scmp.ne.s32.totalorder %s96, %s97
      %p108 = scmp.eq.s32.totalorder %s20, 0
      %p109 = por %p107, %p108
      %p110 = scmp.ne.s32.totalorder %s96, %s97
      %p111 = scmp.eq.s32.totalorder %s21, 1
      %p112 = por %p110, %p111
      %p114 = scmp.ne.s32.totalorder %s97, %s113
      %p115 = scmp.eq.s32.totalorder %s21, 0
      %p116 = por %p114, %p115
      %p117 = scmp.le.s32.totalorder 1, %s15
      %p118 = scmp.lt.s32.totalorder %s15, 3
      %p119 = pnand %p117, %p118
      %p120 = pneg %p119
      // Predicated region
      $region9: #{tpu_custom_call.1} parent=5 // pred_check
        _
      $region10: #{tpu_custom_call.1} parent=5 // pred_check_branch
        %122 = sbr.rel (%p119) target = $region12
      $region11: #{tpu_custom_call.1} parent=5 // pred_region
        %s123 = ssub.s32 %s15, 1
        // Predicated region
        $region13: #{tpu_custom_call.1} parent=11 // pred_check
          %p124 = pneg %p53
        $region14: #{tpu_custom_call.1} parent=11 // pred_check_branch
          %126 = sbr.rel (%p124) target = $region16
        $region15: #{tpu_custom_call.1} parent=11 // pred_region
          %s127 = smul.u32 12, %s24
          %s129 = ssub.s32 192, 192
          %130 = vsyncadd [#allocation3], %s129
          %s131 = smul.addr %s127, 16
          %s132 = scalar_lea.hbm %s0, %s131
          %s134 = sshll.u32 [#allocation2], 4
          %s135 = int_to_ptr.vmem [resolvable:$true] %s134
          %137 = dma.hbm_to_vmem [thread:$0]  %s132, 192, %s135, [#allocation3]
        $region16: #{tpu_custom_call.1} parent=11 // pred_fallthru
          _
      $region12: #{tpu_custom_call.1} parent=5 // pred_fallthru
        _
      %p138 = scmp.lt.s32.totalorder %s15, 2
      // Predicated region
      $region17: #{tpu_custom_call.1} parent=5 // pred_check
        %p139 = pneg %p138
      $region18: #{tpu_custom_call.1} parent=5 // pred_check_branch
        %141 = sbr.rel (%p139) target = $region20
      $region19: #{tpu_custom_call.1} parent=5 // pred_region
        // Predicated region
        $region21: #{tpu_custom_call.1} parent=19 // pred_check
          %p142 = pneg %p75
        $region22: #{tpu_custom_call.1} parent=19 // pred_check_branch
          %144 = sbr.rel (%p142) target = $region24
        $region23: #{tpu_custom_call.1} parent=19 // pred_region
          %s145 = sand.u32 %s65, 1
          %s146 = scalar_lea.sflag [#allocation6], %s145
          %s147 = sand.u32 %s65, 1
          %s148 = smul.addr %s147, 24
          %s149 = scalar_lea.vmem [#allocation5], %s148
          %s150 = smul.u32 12, %s22
          %s152 = ssub.s32 384, 384
          %153 = vsyncadd %s146, %s152
          %s154 = smul.addr %s23, 24
          %s155 = sadd.s32 %s150, %s154
          %s156 = smul.addr %s155, 32
          %s157 = scalar_lea.hbm %s1, %s156
          %s159 = sshll.u32 %s149, 4
          %s160 = int_to_ptr.vmem [resolvable:$true] %s159
          %162 = dma.hbm_to_vmem [thread:$0]  %s157, 384, %s160, %s146
        $region24: #{tpu_custom_call.1} parent=19 // pred_fallthru
          _
      $region20: #{tpu_custom_call.1} parent=5 // pred_fallthru
        _
      %p163 = scmp.le.s32.totalorder 1, %s15
      %p164 = scmp.lt.s32.totalorder %s15, 3
      %p165 = pnand %p163, %p164
      %p166 = pneg %p165
      // Predicated region
      $region25: #{tpu_custom_call.1} parent=5 // pred_check
        _
      $region26: #{tpu_custom_call.1} parent=5 // pred_check_branch
        %168 = sbr.rel (%p165) target = $region28
      $region27: #{tpu_custom_call.1} parent=5 // pred_region
        %s169 = ssub.s32 %s15, 1
        // Predicated region
        $region29: #{tpu_custom_call.1} parent=27 // pred_check
          %p170 = pneg %p53
        $region30: #{tpu_custom_call.1} parent=27 // pred_check_branch
          %172 = sbr.rel (%p170) target = $region32
        $region31: #{tpu_custom_call.1} parent=27 // pred_region
          %173 = dma.done [#allocation3], 192
        $region32: #{tpu_custom_call.1} parent=27 // pred_fallthru
          _
        %s174 = sand.u32 %s68, 1
        %s175 = scalar_lea.sflag [#allocation6], %s174
        %s176 = sand.u32 %s68, 1
        %s177 = smul.addr %s176, 24
        %s178 = scalar_lea.vmem [#allocation5], %s177
        // Predicated region
        $region33: #{tpu_custom_call.1} parent=27 // pred_check
          %p179 = pneg %p81
        $region34: #{tpu_custom_call.1} parent=27 // pred_check_branch
          %181 = sbr.rel (%p179) target = $region36
        $region35: #{tpu_custom_call.1} parent=27 // pred_region
          %182 = dma.done %s175, 384
        $region36: #{tpu_custom_call.1} parent=27 // pred_fallthru
          _
        %p183 = pneg %p53
        %p184 = pneg %p50
        %s185 = sand.u32 %s68, 1
        %s186 = scalar_lea.sflag [#allocation6], %s185
        %s187 = sand.u32 %s68, 1
        %s188 = smul.addr %s187, 24
        %s189 = scalar_lea.vmem [#allocation5], %s188
        %p190 = pneg %p81
        %p191 = pneg %p78
        %p192 = pneg %p109
        %p193 = pneg %p106
        %s194 = sand.u32 %s96, 1
        %s195 = scalar_lea.sflag [#allocation4], %s194
        %s196 = sand.u32 %s96, 1
        %s197 = smul.addr %s196, 24
        %s198 = scalar_lea.vmem [#allocation7], %s197
        %s199 = smul.u32 12, %s24
        %s200 = smul.u32 12, %s24
        %s201 = smul.u32 12, %s24
        %v202 = vld [vmem:[%s178] sm:$0xff]
        %v203 = vld [vmem:[%s178 + $0x8] sm:$0xff]
        %v204 = vld [vmem:[%s178 + $0x10] sm:$0xff]
        %v205 = vld [vmem:[#allocation2] sm:$0xff]
        %v206 = vld [vmem:[#allocation2 + $0x8] sm:$0xf]
        %v209 = vlaneseq
        %v210 = vshrl.u32 %v209, 7
        %v211 = vsub.s32 0, %v210
        %v212 = vrot.slane %v205, %v211
        %v213 = vlaneseq
        %v214 = vshrl.u32 %v213, 7
        %v215 = vsub.s32 1, %v214
        %v216 = vrot.slane %v205, %v215
        %v217 = vlaneseq
        %v218 = vshrl.u32 %v217, 7
        %v219 = vsub.s32 2, %v218
        %v220 = vrot.slane %v205, %v219
        %v221 = vlaneseq
        %v222 = vshrl.u32 %v221, 7
        %v223 = vsub.s32 3, %v222
        %v224 = vrot.slane %v205, %v223
        %v225 = vlaneseq
        %v226 = vshrl.u32 %v225, 7
        %v227 = vsub.s32 4, %v226
        %v228 = vrot.slane %v205, %v227
        %v229 = vlaneseq
        %v230 = vshrl.u32 %v229, 7
        %v231 = vsub.s32 5, %v230
        %v232 = vrot.slane %v205, %v231
        %v233 = vlaneseq
        %v234 = vshrl.u32 %v233, 7
        %v235 = vsub.s32 6, %v234
        %v236 = vrot.slane %v205, %v235
        %v237 = vlaneseq
        %v238 = vshrl.u32 %v237, 7
        %v239 = vsub.s32 7, %v238
        %v240 = vrot.slane %v205, %v239
        %v241 = vlaneseq
        %v242 = vshrl.u32 %v241, 7
        %v243 = vsub.s32 0, %v242
        %v244 = vrot.slane %v206, %v243
        %v245 = vlaneseq
        %v246 = vshrl.u32 %v245, 7
        %v247 = vsub.s32 1, %v246
        %v248 = vrot.slane %v206, %v247
        %v249 = vlaneseq
        %v250 = vshrl.u32 %v249, 7
        %v251 = vsub.s32 2, %v250
        %v252 = vrot.slane %v206, %v251
        %v253 = vlaneseq
        %v254 = vshrl.u32 %v253, 7
        %v255 = vsub.s32 3, %v254
        %v256 = vrot.slane %v206, %v255
        %v257 = vcombine.low %v212, %v216
        %v258 = vcombine.low %v220, %v224
        %v260 = vunpack.c.l.s4 1983009808
        %v261 = vunpack.c.0.s8 %v260
        %v262 = vlaneseq
        %v263 = vshrl.u32 %v262, 7
        %v264 = vsub.s32 %v261, %v263
        %v265 = vrot.slane %v257, %v264
        %v267 = vunpack.c.l.s4 1983009808
        %v268 = vunpack.c.0.s8 %v267
        %v269 = vlaneseq
        %v270 = vshrl.u32 %v269, 7
        %v271 = vsub.s32 %v268, %v270
        %v272 = vrot.slane %v258, %v271
        %v273 = vcombine.low %v265, %v272
        %v274 = vcombine.low %v228, %v232
        %v275 = vcombine.low %v236, %v240
        %v277 = vunpack.c.l.s4 1983009808
        %v278 = vunpack.c.0.s8 %v277
        %v279 = vlaneseq
        %v280 = vshrl.u32 %v279, 7
        %v281 = vsub.s32 %v278, %v280
        %v282 = vrot.slane %v274, %v281
        %v284 = vunpack.c.l.s4 1983009808
        %v285 = vunpack.c.0.s8 %v284
        %v286 = vlaneseq
        %v287 = vshrl.u32 %v286, 7
        %v288 = vsub.s32 %v285, %v287
        %v289 = vrot.slane %v275, %v288
        %v290 = vcombine.low %v282, %v289
        %v291 = vcombine.low %v244, %v248
        %v292 = vcombine.low %v252, %v256
        %v294 = vunpack.c.l.s4 1983009808
        %v295 = vunpack.c.0.s8 %v294
        %v296 = vlaneseq
        %v297 = vshrl.u32 %v296, 7
        %v298 = vsub.s32 %v295, %v297
        %v299 = vrot.slane %v291, %v298
        %v301 = vunpack.c.l.s4 1983009808
        %v302 = vunpack.c.0.s8 %v301
        %v303 = vlaneseq
        %v304 = vshrl.u32 %v303, 7
        %v305 = vsub.s32 %v302, %v304
        %v306 = vrot.slane %v292, %v305
        %v307 = vcombine.low %v299, %v306
        %v311 = vadd.f32 %v202, %v273
        %v312 = vadd.f32 %v203, %v290
        %v313 = vadd.f32 %v204, %v307
        %314 = vst [vmem:[%s198] sm:$0xff] %v311
        %315 = vst [vmem:[%s198 + $0x8] sm:$0xff] %v312
        %316 = vst [vmem:[%s198 + $0x10] sm:$0xff] %v313
        %s317 = sand.u32 %s96, 1
        %s318 = scalar_lea.sflag [#allocation4], %s317
        %s319 = sand.u32 %s96, 1
        %s320 = smul.addr %s319, 24
        %s321 = scalar_lea.vmem [#allocation7], %s320
        // Predicated region
        $region37: #{tpu_custom_call.1} parent=27 // pred_check
          %p322 = pneg %p106
        $region38: #{tpu_custom_call.1} parent=27 // pred_check_branch
          %324 = sbr.rel (%p322) target = $region40
        $region39: #{tpu_custom_call.1} parent=27 // pred_region
          %s325 = smul.u32 12, %s24
          %s327 = ssub.s32 384, 384
          %328 = vsyncadd %s318, %s327
          %s329 = smul.addr %s25, 24
          %s330 = sadd.s32 %s325, %s329
          %s331 = smul.addr %s330, 32
          %s332 = scalar_lea.hbm %s2, %s331
          %s334 = sshll.u32 %s321, 4
          %s335 = int_to_ptr.vmem [resolvable:$true] %s334
          %337 = dma.vmem_to_hbm [thread:$0]  %s335, 384, %s332, %s318
        $region40: #{tpu_custom_call.1} parent=27 // pred_fallthru
          _
      $region28: #{tpu_custom_call.1} parent=5 // pred_fallthru
        _
      %p338 = scmp.le.s32.totalorder 2, %s15
      // Predicated region
      $region41: #{tpu_custom_call.1} parent=5 // pred_check
        %p339 = pneg %p338
      $region42: #{tpu_custom_call.1} parent=5 // pred_check_branch
        %341 = sbr.rel (%p339) target = $region44
      $region43: #{tpu_custom_call.1} parent=5 // pred_region
        %s342 = ssub.s32 %s15, 2
        // Predicated region
        $region45: #{tpu_custom_call.1} parent=43 // pred_check
          %p343 = pneg %p112
        $region46: #{tpu_custom_call.1} parent=43 // pred_check_branch
          %345 = sbr.rel (%p343) target = $region48
        $region47: #{tpu_custom_call.1} parent=43 // pred_region
          %s346 = sand.u32 %s97, 1
          %s347 = scalar_lea.sflag [#allocation4], %s346
          %s348 = sand.u32 %s97, 1
          %s349 = smul.addr %s348, 24
          %s350 = scalar_lea.vmem [#allocation7], %s349
          %351 = dma.done %s347, 384
        $region48: #{tpu_custom_call.1} parent=43 // pred_fallthru
          _
      $region44: #{tpu_custom_call.1} parent=5 // pred_fallthru
        _
    $region6: #{tpu_custom_call.1} parent=1 // loop_footer
      %s19 = sadd.s32 1, %s15
    $region7: #{tpu_custom_call.1} parent=1 // loop_footer_branch
      %14 = sbr.rel target = $region3
    $region8: #{tpu_custom_call.1} parent=1 // loop_exit
      _
    %352 = vsyncpa [#allocation3], 1
    %s353 = scalar_lea.sflag [#allocation3], 1
    %354 = vsyncpa %s353, 1
    %355 = vsyncpa [#allocation6], 1
    %s356 = scalar_lea.sflag [#allocation6], 1
    %357 = vsyncpa %s356, 1
    %358 = vsyncpa [#allocation4], 1
    %s359 = scalar_lea.sflag [#allocation4], 1
    %360 = vsyncpa %s359, 1

// kernel: tpu_custom_call.1
$region0: #{tpu_custom_call.1}
  #allocation0 [shape = 'u32[]', space=smem, size = 0x4, offset = 0x4, fixed_abs, tag = 'smem constant byte address 0x4 - core index']
  #allocation1 [shape = 'u32[144,128]{1,0:T(1,128)}', space=vmem, size = 0x12000, scoped, tag = 'internal scratch']
  %s0 = inlined_call_operand.hbm [shape: f32[1,3072], index: 0, kind: input, shape index: {}]
  %s1 = inlined_call_operand.hbm [shape: f32[2,3072], index: 1, kind: input, shape index: {}]
  %s2 = inlined_call_operand.hbm [shape: f32[2,3072], index: 2, kind: output, shape index: {}]
  %s3 = sld [smem:[#allocation0]]
  $region49: #{tpu_custom_call.1} parent=0
    _
  %s5 = ssub.s32 1, %s3
  %s6 = scalar_select 0, %s5, %s3
  $region1: #{tpu_custom_call.1} parent=0
    #allocation2 [shape = 'u8[12288]{0}', space=vmem, size = 0x3000, scoped, tag = 'input window, operand 0']
    #allocation3 [shape = 's32[2]{0}', space=sflag, size = 0x8, scoped, tag = 'scoped memory for tpu_custom_call.1']
    #allocation4 [shape = 's32[2]{0}', space=sflag, size = 0x8, scoped, tag = 'scoped memory for tpu_custom_call.1']
    #allocation5 [shape = 'u8[24576]{0}', space=vmem, size = 0x6000, scoped, tag = 'input window, operand 1']
    #allocation6 [shape = 's32[2]{0}', space=sflag, size = 0x8, scoped, tag = 'scoped memory for tpu_custom_call.1']
    #allocation7 [shape = 'u8[24576]{0}', space=vmem, size = 0x6000, scoped, tag = 'output window, operand 0']
    %7 = vsyncpa [#allocation3], 0
    %s8 = scalar_lea.sflag [#allocation3], 1
    %9 = vsyncpa %s8, 0
    %10 = vsyncpa [#allocation6], 0
    %s11 = scalar_lea.sflag [#allocation6], 1
    %12 = vsyncpa %s11, 0
    %13 = vsyncpa [#allocation4], 0
    %s14 = scalar_lea.sflag [#allocation4], 1
    %15 = vsyncpa %s14, 0
    loop: start=0, step=1, limit=4
    $region2: #{tpu_custom_call.1} parent=1 // loop_pre_header
      _
    $region3: #{tpu_custom_call.1} parent=1 // loop_header
      %s17 = sphi 0, %s21
      %p18 = scmp.ge.s32.totalorder %s17, 4
      %s24 = sphi 0, %s36
      %s25 = sphi 0, %s32
      %s26 = sphi 0, %s24
      %s27 = sphi 0, %s25
      %s28 = sphi 0, %s26
      %s29 = sphi 0, %s27
      %s39 = sphi 0, %s41
      %s42 = sphi 0, %s39
      %s43 = sphi 0, %s42
      %s59 = sphi 0, %s43
      %s67 = sphi 0, %s69
      %s70 = sphi 0, %s67
      %s71 = sphi 0, %s70
      %s87 = sphi 0, %s71
      %s95 = sphi 0, %s97
      %s98 = sphi 0, %s95
      %s99 = sphi 0, %s98
      %s115 = sphi 0, %s99
    $region4: #{tpu_custom_call.1} parent=1 // loop_header_branch
      %20 = sbr.rel (%p18) target = $region8
    $region5: #{tpu_custom_call.1} parent=1 // loop_body
      %s22 = ssub.s32 %s17, 1
      %s23 = ssub.s32 %s17, 2
      %s30 = sadd.s32 1, %s25
      %p31 = scmp.ge.s32.totalorder %s30, 1
      %s32 = scalar_select %p31, 0, %s30
      %s33 = sadd.s32 1, %s24
      %s34 = scalar_select %p31, %s33, %s24
      %p35 = scmp.ge.s32.totalorder %s34, 2
      %s36 = scalar_select %p35, 0, %s34
      %s37 = ssub.s32 %s24, %s36
      %p38 = scmp.eq.s32.totalorder %s37, 0
      %s40 = sadd.s32 %s39, 1
      %s41 = scalar_select %p38, %s39, %s40
      %p44 = pneg %p38
      %p45 = scmp.eq.s32.totalorder %s17, 1
      %p46 = por %p44, %p45
      %p47 = scmp.ne.s32.totalorder %s39, %s42
      %p48 = scmp.eq.s32.totalorder %s17, 0
      %p49 = por %p47, %p48
      %p50 = scmp.ne.s32.totalorder %s39, %s42
      %p51 = scmp.eq.s32.totalorder %s22, 1
      %p52 = por %p50, %p51
      %p53 = scmp.ne.s32.totalorder %s42, %s43
      %p54 = scmp.eq.s32.totalorder %s22, 0
      %p55 = por %p53, %p54
      %p56 = scmp.ne.s32.totalorder %s42, %s43
      %p57 = scmp.eq.s32.totalorder %s23, 1
      %p58 = por %p56, %p57
      %p60 = scmp.ne.s32.totalorder %s43, %s59
      %p61 = scmp.eq.s32.totalorder %s23, 0
      %p62 = por %p60, %p61
      %s63 = ssub.s32 %s25, %s32
      %s64 = ssub.s32 %s24, %s36
      %s65 = sor.u32 %s63, %s64
      %p66 = scmp.eq.s32.totalorder %s65, 0
      %s68 = sadd.s32 %s67, 1
      %s69 = scalar_select %p66, %s67, %s68
      %p72 = pneg %p66
      %p73 = scmp.eq.s32.totalorder %s17, 1
      %p74 = por %p72, %p73
      %p75 = scmp.ne.s32.totalorder %s67, %s70
      %p76 = scmp.eq.s32.totalorder %s17, 0
      %p77 = por %p75, %p76
      %p78 = scmp.ne.s32.totalorder %s67, %s70
      %p79 = scmp.eq.s32.totalorder %s22, 1
      %p80 = por %p78, %p79
      %p81 = scmp.ne.s32.totalorder %s70, %s71
      %p82 = scmp.eq.s32.totalorder %s22, 0
      %p83 = por %p81, %p82
      %p84 = scmp.ne.s32.totalorder %s70, %s71
      %p85 = scmp.eq.s32.totalorder %s23, 1
      %p86 = por %p84, %p85
      %p88 = scmp.ne.s32.totalorder %s71, %s87
      %p89 = scmp.eq.s32.totalorder %s23, 0
      %p90 = por %p88, %p89
      %s91 = ssub.s32 %s25, %s32
      %s92 = ssub.s32 %s24, %s36
      %s93 = sor.u32 %s91, %s92
      %p94 = scmp.eq.s32.totalorder %s93, 0
      %s96 = sadd.s32 %s95, 1
      %s97 = scalar_select %p94, %s95, %s96
      %p100 = pneg %p94
      %p101 = scmp.eq.s32.totalorder %s17, 1
      %p102 = por %p100, %p101
      %p103 = scmp.ne.s32.totalorder %s95, %s98
      %p104 = scmp.eq.s32.totalorder %s17, 0
      %p105 = por %p103, %p104
      %p106 = scmp.ne.s32.totalorder %s95, %s98
      %p107 = scmp.eq.s32.totalorder %s22, 1
      %p108 = por %p106, %p107
      %p109 = scmp.ne.s32.totalorder %s98, %s99
      %p110 = scmp.eq.s32.totalorder %s22, 0
      %p111 = por %p109, %p110
      %p112 = scmp.ne.s32.totalorder %s98, %s99
      %p113 = scmp.eq.s32.totalorder %s23, 1
      %p114 = por %p112, %p113
      %p116 = scmp.ne.s32.totalorder %s99, %s115
      %p117 = scmp.eq.s32.totalorder %s23, 0
      %p118 = por %p116, %p117
      %p119 = scmp.le.s32.totalorder 1, %s17
      %p120 = scmp.lt.s32.totalorder %s17, 3
      %p121 = pnand %p119, %p120
      %p122 = pneg %p121
      // Predicated region
      $region9: #{tpu_custom_call.1} parent=5 // pred_check
        _
      $region10: #{tpu_custom_call.1} parent=5 // pred_check_branch
        %124 = sbr.rel (%p121) target = $region12
      $region11: #{tpu_custom_call.1} parent=5 // pred_region
        %s125 = ssub.s32 %s17, 1
      $region12: #{tpu_custom_call.1} parent=5 // pred_fallthru
        _
      %p126 = scmp.lt.s32.totalorder %s17, 2
      // Predicated region
      $region13: #{tpu_custom_call.1} parent=5 // pred_check
        %p127 = pneg %p126
      $region14: #{tpu_custom_call.1} parent=5 // pred_check_branch
        %129 = sbr.rel (%p127) target = $region16
      $region15: #{tpu_custom_call.1} parent=5 // pred_region
        // Predicated region
        $region17: #{tpu_custom_call.1} parent=15 // pred_check
          %p130 = pneg %p49
        $region18: #{tpu_custom_call.1} parent=15 // pred_check_branch
          %132 = sbr.rel (%p130) target = $region20
        $region19: #{tpu_custom_call.1} parent=15 // pred_region
          %s133 = sand.u32 %s39, 1
          %s134 = scalar_lea.sflag [#allocation3], %s133
          %s135 = sand.u32 %s39, 1
          %s136 = smul.addr %s135, 12
          %s137 = scalar_lea.vmem [#allocation2], %s136
          %s138 = smul.u32 12, %s24
          %s140 = ssub.s32 192, 192
          %141 = vsyncadd %s134, %s140
          %s142 = smul.addr %s138, 16
          %s143 = scalar_lea.hbm %s0, %s142
          %s145 = sshll.u32 %s137, 4
          %s146 = int_to_ptr.vmem [resolvable:$true] %s145
          %148 = dma.hbm_to_vmem [thread:$0]  %s143, 192, %s146, %s134
        $region20: #{tpu_custom_call.1} parent=15 // pred_fallthru
          _
        // Predicated region
        $region21: #{tpu_custom_call.1} parent=15 // pred_check
          %p149 = pneg %p77
        $region22: #{tpu_custom_call.1} parent=15 // pred_check_branch
          %151 = sbr.rel (%p149) target = $region24
        $region23: #{tpu_custom_call.1} parent=15 // pred_region
          %s152 = sand.u32 %s67, 1
          %s153 = scalar_lea.sflag [#allocation6], %s152
          %s154 = sand.u32 %s67, 1
          %s155 = smul.addr %s154, 24
          %s156 = scalar_lea.vmem [#allocation5], %s155
          %s157 = smul.u32 12, %s24
          %s159 = ssub.s32 384, 384
          %160 = vsyncadd %s153, %s159
          %s161 = smul.addr %s25, 24
          %s162 = sadd.s32 %s157, %s161
          %s163 = smul.addr %s162, 32
          %s164 = scalar_lea.hbm %s1, %s163
          %s166 = sshll.u32 %s156, 4
          %s167 = int_to_ptr.vmem [resolvable:$true] %s166
          %169 = dma.hbm_to_vmem [thread:$0]  %s164, 384, %s167, %s153
        $region24: #{tpu_custom_call.1} parent=15 // pred_fallthru
          _
      $region16: #{tpu_custom_call.1} parent=5 // pred_fallthru
        _
      %p170 = scmp.le.s32.totalorder 1, %s17
      %p171 = scmp.lt.s32.totalorder %s17, 3
      %p172 = pnand %p170, %p171
      %p173 = pneg %p172
      // Predicated region
      $region25: #{tpu_custom_call.1} parent=5 // pred_check
        _
      $region26: #{tpu_custom_call.1} parent=5 // pred_check_branch
        %175 = sbr.rel (%p172) target = $region28
      $region27: #{tpu_custom_call.1} parent=5 // pred_region
        %s176 = ssub.s32 %s17, 1
        %s177 = sand.u32 %s42, 1
        %s178 = scalar_lea.sflag [#allocation3], %s177
        %s179 = sand.u32 %s42, 1
        %s180 = smul.addr %s179, 12
        %s181 = scalar_lea.vmem [#allocation2], %s180
        // Predicated region
        $region29: #{tpu_custom_call.1} parent=27 // pred_check
          %p182 = pneg %p55
        $region30: #{tpu_custom_call.1} parent=27 // pred_check_branch
          %184 = sbr.rel (%p182) target = $region32
        $region31: #{tpu_custom_call.1} parent=27 // pred_region
          %185 = dma.done %s178, 192
        $region32: #{tpu_custom_call.1} parent=27 // pred_fallthru
          _
        %s186 = sand.u32 %s70, 1
        %s187 = scalar_lea.sflag [#allocation6], %s186
        %s188 = sand.u32 %s70, 1
        %s189 = smul.addr %s188, 24
        %s190 = scalar_lea.vmem [#allocation5], %s189
        // Predicated region
        $region33: #{tpu_custom_call.1} parent=27 // pred_check
          %p191 = pneg %p83
        $region34: #{tpu_custom_call.1} parent=27 // pred_check_branch
          %193 = sbr.rel (%p191) target = $region36
        $region35: #{tpu_custom_call.1} parent=27 // pred_region
          %194 = dma.done %s187, 384
        $region36: #{tpu_custom_call.1} parent=27 // pred_fallthru
          _
        %s195 = sand.u32 %s42, 1
        %s196 = scalar_lea.sflag [#allocation3], %s195
        %s197 = sand.u32 %s42, 1
        %s198 = smul.addr %s197, 12
        %s199 = scalar_lea.vmem [#allocation2], %s198
        %p200 = pneg %p55
        %p201 = pneg %p52
        %s202 = sand.u32 %s70, 1
        %s203 = scalar_lea.sflag [#allocation6], %s202
        %s204 = sand.u32 %s70, 1
        %s205 = smul.addr %s204, 24
        %s206 = scalar_lea.vmem [#allocation5], %s205
        %p207 = pneg %p83
        %p208 = pneg %p80
        %p209 = pneg %p111
        %p210 = pneg %p108
        %s211 = sand.u32 %s98, 1
        %s212 = scalar_lea.sflag [#allocation4], %s211
        %s213 = sand.u32 %s98, 1
        %s214 = smul.addr %s213, 24
        %s215 = scalar_lea.vmem [#allocation7], %s214
        %s216 = smul.u32 12, %s26
        %s217 = smul.u32 12, %s26
        %s218 = smul.u32 12, %s26
        %v219 = vld [vmem:[%s190] sm:$0xff]
        %v220 = vld [vmem:[%s190 + $0x8] sm:$0xff]
        %v221 = vld [vmem:[%s190 + $0x10] sm:$0xff]
        %v222 = vld [vmem:[%s181] sm:$0xff]
        %v223 = vld [vmem:[%s181 + $0x8] sm:$0xf]
        %v226 = vlaneseq
        %v227 = vshrl.u32 %v226, 7
        %v228 = vsub.s32 0, %v227
        %v229 = vrot.slane %v222, %v228
        %v230 = vlaneseq
        %v231 = vshrl.u32 %v230, 7
        %v232 = vsub.s32 1, %v231
        %v233 = vrot.slane %v222, %v232
        %v234 = vlaneseq
        %v235 = vshrl.u32 %v234, 7
        %v236 = vsub.s32 2, %v235
        %v237 = vrot.slane %v222, %v236
        %v238 = vlaneseq
        %v239 = vshrl.u32 %v238, 7
        %v240 = vsub.s32 3, %v239
        %v241 = vrot.slane %v222, %v240
        %v242 = vlaneseq
        %v243 = vshrl.u32 %v242, 7
        %v244 = vsub.s32 4, %v243
        %v245 = vrot.slane %v222, %v244
        %v246 = vlaneseq
        %v247 = vshrl.u32 %v246, 7
        %v248 = vsub.s32 5, %v247
        %v249 = vrot.slane %v222, %v248
        %v250 = vlaneseq
        %v251 = vshrl.u32 %v250, 7
        %v252 = vsub.s32 6, %v251
        %v253 = vrot.slane %v222, %v252
        %v254 = vlaneseq
        %v255 = vshrl.u32 %v254, 7
        %v256 = vsub.s32 7, %v255
        %v257 = vrot.slane %v222, %v256
        %v258 = vlaneseq
        %v259 = vshrl.u32 %v258, 7
        %v260 = vsub.s32 0, %v259
        %v261 = vrot.slane %v223, %v260
        %v262 = vlaneseq
        %v263 = vshrl.u32 %v262, 7
        %v264 = vsub.s32 1, %v263
        %v265 = vrot.slane %v223, %v264
        %v266 = vlaneseq
        %v267 = vshrl.u32 %v266, 7
        %v268 = vsub.s32 2, %v267
        %v269 = vrot.slane %v223, %v268
        %v270 = vlaneseq
        %v271 = vshrl.u32 %v270, 7
        %v272 = vsub.s32 3, %v271
        %v273 = vrot.slane %v223, %v272
        %v274 = vcombine.low %v229, %v233
        %v275 = vcombine.low %v237, %v241
        %v277 = vunpack.c.l.s4 1983009808
        %v278 = vunpack.c.0.s8 %v277
        %v279 = vlaneseq
        %v280 = vshrl.u32 %v279, 7
        %v281 = vsub.s32 %v278, %v280
        %v282 = vrot.slane %v274, %v281
        %v284 = vunpack.c.l.s4 1983009808
        %v285 = vunpack.c.0.s8 %v284
        %v286 = vlaneseq
        %v287 = vshrl.u32 %v286, 7
        %v288 = vsub.s32 %v285, %v287
        %v289 = vrot.slane %v275, %v288
        %v290 = vcombine.low %v282, %v289
        %v291 = vcombine.low %v245, %v249
        %v292 = vcombine.low %v253, %v257
        %v294 = vunpack.c.l.s4 1983009808
        %v295 = vunpack.c.0.s8 %v294
        %v296 = vlaneseq
        %v297 = vshrl.u32 %v296, 7
        %v298 = vsub.s32 %v295, %v297
        %v299 = vrot.slane %v291, %v298
        %v301 = vunpack.c.l.s4 1983009808
        %v302 = vunpack.c.0.s8 %v301
        %v303 = vlaneseq
        %v304 = vshrl.u32 %v303, 7
        %v305 = vsub.s32 %v302, %v304
        %v306 = vrot.slane %v292, %v305
        %v307 = vcombine.low %v299, %v306
        %v308 = vcombine.low %v261, %v265
        %v309 = vcombine.low %v269, %v273
        %v311 = vunpack.c.l.s4 1983009808
        %v312 = vunpack.c.0.s8 %v311
        %v313 = vlaneseq
        %v314 = vshrl.u32 %v313, 7
        %v315 = vsub.s32 %v312, %v314
        %v316 = vrot.slane %v308, %v315
        %v318 = vunpack.c.l.s4 1983009808
        %v319 = vunpack.c.0.s8 %v318
        %v320 = vlaneseq
        %v321 = vshrl.u32 %v320, 7
        %v322 = vsub.s32 %v319, %v321
        %v323 = vrot.slane %v309, %v322
        %v324 = vcombine.low %v316, %v323
        %v328 = vadd.f32 %v219, %v290
        %v329 = vadd.f32 %v220, %v307
        %v330 = vadd.f32 %v221, %v324
        %331 = vst [vmem:[%s215] sm:$0xff] %v328
        %332 = vst [vmem:[%s215 + $0x8] sm:$0xff] %v329
        %333 = vst [vmem:[%s215 + $0x10] sm:$0xff] %v330
        %s334 = sand.u32 %s98, 1
        %s335 = scalar_lea.sflag [#allocation4], %s334
        %s336 = sand.u32 %s98, 1
        %s337 = smul.addr %s336, 24
        %s338 = scalar_lea.vmem [#allocation7], %s337
        // Predicated region
        $region37: #{tpu_custom_call.1} parent=27 // pred_check
          %p339 = pneg %p108
        $region38: #{tpu_custom_call.1} parent=27 // pred_check_branch
          %341 = sbr.rel (%p339) target = $region40
        $region39: #{tpu_custom_call.1} parent=27 // pred_region
          %s342 = smul.u32 12, %s26
          %s344 = ssub.s32 384, 384
          %345 = vsyncadd %s335, %s344
          %s346 = smul.addr %s27, 24
          %s347 = sadd.s32 %s342, %s346
          %s348 = smul.addr %s347, 32
          %s349 = scalar_lea.hbm %s2, %s348
          %s351 = sshll.u32 %s338, 4
          %s352 = int_to_ptr.vmem [resolvable:$true] %s351
          %354 = dma.vmem_to_hbm [thread:$0]  %s352, 384, %s349, %s335
        $region40: #{tpu_custom_call.1} parent=27 // pred_fallthru
          _
      $region28: #{tpu_custom_call.1} parent=5 // pred_fallthru
        _
      %p355 = scmp.le.s32.totalorder 2, %s17
      // Predicated region
      $region41: #{tpu_custom_call.1} parent=5 // pred_check
        %p356 = pneg %p355
      $region42: #{tpu_custom_call.1} parent=5 // pred_check_branch
        %358 = sbr.rel (%p356) target = $region44
      $region43: #{tpu_custom_call.1} parent=5 // pred_region
        %s359 = ssub.s32 %s17, 2
        // Predicated region
        $region45: #{tpu_custom_call.1} parent=43 // pred_check
          %p360 = pneg %p114
        $region46: #{tpu_custom_call.1} parent=43 // pred_check_branch
          %362 = sbr.rel (%p360) target = $region48
        $region47: #{tpu_custom_call.1} parent=43 // pred_region
          %s363 = sand.u32 %s99, 1
          %s364 = scalar_lea.sflag [#allocation4], %s363
          %s365 = sand.u32 %s99, 1
          %s366 = smul.addr %s365, 24
          %s367 = scalar_lea.vmem [#allocation7], %s366
          %368 = dma.done %s364, 384
        $region48: #{tpu_custom_call.1} parent=43 // pred_fallthru
          _
      $region44: #{tpu_custom_call.1} parent=5 // pred_fallthru
        _
    $region6: #{tpu_custom_call.1} parent=1 // loop_footer
      %s21 = sadd.s32 1, %s17
    $region7: #{tpu_custom_call.1} parent=1 // loop_footer_branch
      %16 = sbr.rel target = $region3
    $region8: #{tpu_custom_call.1} parent=1 // loop_exit
      _
    %369 = vsyncpa [#allocation3], 1
    %s370 = scalar_lea.sflag [#allocation3], 1
    %371 = vsyncpa %s370, 1
    %372 = vsyncpa [#allocation6], 1
    %s373 = scalar_lea.sflag [#allocation6], 1
    %374 = vsyncpa %s373, 1
    %375 = vsyncpa [#allocation4], 1
    %s376 = scalar_lea.sflag [#allocation4], 1
    %377 = vsyncpa %s376, 1

</llo_original>
